<compile_context>
chip_gen: v7x
topology: tpu7x:2x2x1
jax: 0.10.0
libtpu: 0.0.40
codegen_flags: <defaults>
</compile_context>

<pallas_src>
import jax
import jax.numpy as jnp
from jax.experimental import pallas as pl
from jax.experimental.pallas import tpu as pltpu


def mlp_kernel(x_ref, w1_ref, b1_ref, w2_ref, b2_ref, o_ref):
    # x_ref : (20, TILE_B)  bf16   (feature-major batch tile)
    # w1_ref: (32, 20)      bf16   (PyTorch hidden.weight layout, resident)
    # b1_ref: (32, 1)       f32    (resident)
    # w2_ref: (32, 1)       f32    (predict.weight as a column, resident)
    # b2_ref: (1, 1)        f32    in SMEM (scalar)
    # o_ref : (1, TILE_B)   f32    (lane-dense output slab)

    # Layer 1 on the MXU, f32 accumulate; batch lands on the lane axis.
    h = jnp.dot(w1_ref[...], x_ref[...], preferred_element_type=jnp.float32)
    h = jnp.maximum(h + b1_ref[...], 0.0)                    # (32, TILE_B)

    # Layer 2 (output width 1) as VPU multiply + XLU sublane reduce — no MXU.
    # (Kernel is DMA-bound; do not move this onto the MXU unless a bundle dump
    #  ever shows the VPU/XLU slots saturating.)
    y = jnp.sum(h * w2_ref[...], axis=0, keepdims=True)      # (1, TILE_B)

    o_ref[...] = (y + b2_ref[0, 0]).astype(o_ref.dtype)


def _round_up(n, m):
    return ((n + m - 1) // m) * m


# ~13.6 MB of double-buffered VMEM at this tile (padded math below) — safe on
# v5e (128 MiB physical), v6e (128 MiB) and v7x (64 MiB).
_MAX_TILE_B = 65536


def _choose_tile_b(batch):
    """Pick the batch tile (lanes per grid step)."""
    b128 = _round_up(max(batch, 1), 128)
    if b128 <= 8192:
        # Small-batch fast path: one grid step sized to the batch; avoids the
        # 100x+ padding/DMA waste the old fixed tile_b=1024 had at tiny B.
        return b128
    # Large batch: amortize the ~0.35 us per-step overhead with big tiles, but
    # keep >= 2 grid steps so the "parallel" axis feeds both TCs on v7x.
    tile = min(_MAX_TILE_B, _round_up(-(-b128 // 2), 128))
    return max(tile, 8192)


def net_forward(x, w1, b1, w2, b2, *, tile_b=None):
    """Forward pass of Net.

    x : (B, 20) float32          (batch-major, like the PyTorch input)
    w1: (32, 20), b1: (32,)      -> hidden = Linear(20, 32)   (PyTorch layout)
    w2: (1, 32),  b2: (1,)       -> predict = Linear(32, 1)
    returns (B, 1) float32
    """
    B, in_f = x.shape
    hidden = w1.shape[0]
    out_f = w2.shape[0]
    assert w1.shape == (hidden, in_f) and w2.shape == (out_f, hidden)

    if tile_b is None:
        tile_b = _choose_tile_b(B)
    assert tile_b % 128 == 0
    num_tiles = pl.cdiv(B, tile_b)

    # Wrapper-side layout plumbing: feature-major bf16 x.  No batch padding —
    # Pallas masks the ragged tail block; padded output columns are never read.
    # TODO(synk): if this sits inside a larger pipeline, keep x feature-major
    # bf16 upstream so this transpose/cast pass over x is not re-done per call.
    x_t = x.T.astype(jnp.bfloat16)                     # (20, B)
    w1_b = w1.astype(jnp.bfloat16)                     # (32, 20)
    b1_c = b1.reshape(hidden, 1).astype(jnp.float32)   # (32, 1)
    w2_c = w2.reshape(hidden, 1).astype(jnp.float32)   # (32, 1)
    b2_s = b2.reshape(1, 1).astype(jnp.float32)        # (1, 1) -> SMEM

    # Padded-tile sizes (what actually moves / sits in VMEM):
    #   bf16 uses (16,128) tiling -> 20 feature rows occupy 32 sublanes;
    #   f32 output uses (8,128)   ->  1 output row occupies  8 sublanes.
    x_rows_pad = _round_up(in_f, 16)                   # 20 -> 32
    o_rows_pad = _round_up(out_f, 8)                   # 1  -> 8
    b_pad = num_tiles * tile_b

    # Double-buffered per-step VMEM (+ resident weights + headroom).
    vmem_limit = (2 * x_rows_pad * tile_b * 2          # x blocks, bf16
                  + 2 * o_rows_pad * tile_b * 4        # out blocks, f32
                  + (4 << 20))                         # weights + headroom
    vmem_limit = max(vmem_limit, 8 << 20)

    flops = 2 * b_pad * in_f * hidden + 3 * b_pad * hidden
    bytes_accessed = (x_rows_pad * b_pad * 2           # bf16 x tiles (padded)
                      + o_rows_pad * b_pad * 4         # f32 output tiles
                      + hidden * in_f * 2              # bf16 W1
                      + (2 * hidden + out_f) * 4)      # b1, w2, b2
    cost = pl.CostEstimate(flops=flops, transcendentals=0,
                           bytes_accessed=bytes_accessed)

    out = pl.pallas_call(
        mlp_kernel,
        out_shape=jax.ShapeDtypeStruct((1, B), jnp.float32),
        grid=(num_tiles,),
        in_specs=[
            pl.BlockSpec((in_f, tile_b), lambda i: (0, i)),        # x batch tile
            pl.BlockSpec((hidden, in_f), lambda i: (0, 0)),        # W1 resident
            pl.BlockSpec((hidden, 1), lambda i: (0, 0)),           # b1 resident
            pl.BlockSpec((hidden, 1), lambda i: (0, 0)),           # w2 resident
            pl.BlockSpec(memory_space=pltpu.MemorySpace.SMEM),     # b2 scalar
        ],
        out_specs=pl.BlockSpec((1, tile_b), lambda i: (0, i)),     # lane-dense
        compiler_params=pltpu.CompilerParams(
            dimension_semantics=("parallel",),
            vmem_limit_bytes=int(vmem_limit)),
        cost_estimate=cost,
    )(x_t, w1_b, b1_c, w2_c, b2_s)

    # Back to the PyTorch-shaped (B, 1) output.
    return out[0, :].reshape(B, 1)


def init_params(key):
    # Deterministic init mirroring nn.Linear (PyTorch (out_features, in_features)):
    #   hidden : W1 (32, 20), b1 (32,)
    #   predict: W2 (1, 32),  b2 (1,)
    k1, k2, k3, k4 = jax.random.split(key, 4)
    bound1 = 1.0 / jnp.sqrt(20.0)
    bound2 = 1.0 / jnp.sqrt(32.0)
    w1 = jax.random.uniform(k1, (32, 20), jnp.float32, -bound1, bound1)
    b1 = jax.random.uniform(k2, (32,), jnp.float32, -bound1, bound1)
    w2 = jax.random.uniform(k3, (1, 32), jnp.float32, -bound2, bound2)
    b2 = jax.random.uniform(k4, (1,), jnp.float32, -bound2, bound2)
    return w1, b1, w2, b2


def _reference(x, w1, b1, w2, b2):
    # Pure-JAX reference with the same bf16 quantization of x/W1 the kernel
    # applies (f32 accumulation in both), so the check stays tight.
    xq = x.astype(jnp.bfloat16).astype(jnp.float32)
    w1q = w1.astype(jnp.bfloat16).astype(jnp.float32)
    h = jnp.maximum(
        jnp.dot(xq, w1q.T, precision=jax.lax.Precision.HIGHEST) + b1[None, :], 0.0)
    return jnp.dot(h, w2.T, precision=jax.lax.Precision.HIGHEST) + b2[None, :]


if __name__ == "__main__":
    key = jax.random.PRNGKey(0)
    kx, kp = jax.random.split(key)
    w1, b1, w2, b2 = init_params(kp)

    fwd = jax.jit(net_forward)

    # B=8   : small-batch fast path (single 128-lane tile, MinMax-scaled inputs)
    # B=1000: exercises the ragged (non-multiple-of-128) tail masking path
    for B in (8, 1000):
        x = jax.random.uniform(jax.random.fold_in(kx, B), (B, 20), jnp.float32)
        out = jax.block_until_ready(fwd(x, w1, b1, w2, b2))
        ref = _reference(x, w1, b1, w2, b2)
        assert out.shape == (B, 1)
        assert jnp.allclose(out, ref, atol=1e-4, rtol=1e-4)

    print("KERNEL_OK")
</pallas_src>

<mosaic_0001>
module attributes {stable_mosaic.version = 11 : i64} {
  func.func @mlp_kernel(%arg0: i32, %arg1: memref<20x128xbf16, #tpu.memory_space<vmem>>, %arg2: memref<32x20xbf16, #tpu.memory_space<vmem>>, %arg3: memref<32x1xf32, #tpu.memory_space<vmem>>, %arg4: memref<32x1xf32, #tpu.memory_space<vmem>>, %arg5: memref<1x1xf32, #tpu.memory_space<smem>>, %arg6: memref<1x128xf32, #tpu.memory_space<vmem>>) attributes {dimension_semantics = [#tpu.dimension_semantics<parallel>], iteration_bounds = array<i64: 1>, scalar_prefetch = 0 : i64, scratch_operands = 0 : i64, tpu.core_type = #tpu.core_type<tc>, window_params = [{transform_indices = @transform_0, window_bounds = array<i64: 20, 128>}, {pipeline_mode = #tpu.pipeline_mode<synchronous>, transform_indices = @transform_1, window_bounds = array<i64: 32, 20>}, {pipeline_mode = #tpu.pipeline_mode<synchronous>, transform_indices = @transform_2, window_bounds = array<i64: 32, 1>}, {pipeline_mode = #tpu.pipeline_mode<synchronous>, transform_indices = @transform_3, window_bounds = array<i64: 32, 1>}, {transform_indices = @transform_4, window_bounds = array<i64: 1, 1>}, {transform_indices = @transform_5, window_bounds = array<i64: 1, 128>}]} {
    %c0 = arith.constant 0 : index
    %c0_0 = arith.constant 0 : index
    %0 = vector.load %arg2[%c0, %c0_0] : memref<32x20xbf16, #tpu.memory_space<vmem>>, vector<32x20xbf16>
    %c0_1 = arith.constant 0 : index
    %c0_2 = arith.constant 0 : index
    %1 = vector.load %arg1[%c0_1, %c0_2] : memref<20x128xbf16, #tpu.memory_space<vmem>>, vector<20x128xbf16>
    %cst = arith.constant dense<0.000000e+00> : vector<32x128xf32>
    %2 = tpu.matmul %0, %1, %cst {dimension_numbers = #tpu.dot_dimension_numbers<[1], [0], [0], [1], [0, 0, 1, 1], [], []>} : vector<32x20xbf16>, vector<20x128xbf16>, vector<32x128xf32> -> vector<32x128xf32>
    %c0_3 = arith.constant 0 : index
    %c0_4 = arith.constant 0 : index
    %3 = vector.load %arg3[%c0_3, %c0_4] : memref<32x1xf32, #tpu.memory_space<vmem>>, vector<32x1xf32>
    %4 = vector.broadcast %3 : vector<32x1xf32> to vector<32x128xf32>
    %5 = arith.addf %2, %4 : vector<32x128xf32>
    %cst_5 = arith.constant 0.000000e+00 : f32
    %6 = vector.broadcast %cst_5 : f32 to vector<32x128xf32>
    %7 = arith.maximumf %5, %6 : vector<32x128xf32>
    %c0_6 = arith.constant 0 : index
    %c0_7 = arith.constant 0 : index
    %8 = vector.load %arg4[%c0_6, %c0_7] : memref<32x1xf32, #tpu.memory_space<vmem>>, vector<32x1xf32>
    %9 = vector.broadcast %8 : vector<32x1xf32> to vector<32x128xf32>
    %10 = arith.mulf %7, %9 : vector<32x128xf32>
    %cst_8 = arith.constant dense<0.000000e+00> : vector<128xf32>
    %11 = vector.multi_reduction <add>, %10, %cst_8 [0] : vector<32x128xf32> to vector<128xf32>
    %12 = vector.shape_cast %11 : vector<128xf32> to vector<1x128xf32>
    %c0_9 = arith.constant 0 : index
    %c0_10 = arith.constant 0 : index
    %13 = memref.load %arg5[%c0_9, %c0_10] : memref<1x1xf32, #tpu.memory_space<smem>>
    %14 = vector.broadcast %13 : f32 to vector<1x128xf32>
    %15 = arith.addf %12, %14 : vector<1x128xf32>
    %c0_11 = arith.constant 0 : index
    %c0_12 = arith.constant 0 : index
    %16 = vector.load %arg6[%c0_11, %c0_12] : memref<1x128xf32, #tpu.memory_space<vmem>>, vector<1x128xf32>
    tpu.vector_store %arg6[%c0_11, %c0_12], %15 {strides = array<i32>} : memref<1x128xf32, #tpu.memory_space<vmem>>, vector<1x128xf32>,
    return
  }
  func.func @transform_0(%arg0: i32) -> (i32, i32) {
    %c0_i32 = arith.constant 0 : i32
    %c0_i32_0 = arith.constant 0 : i32
    return %c0_i32, %arg0 : i32, i32
  }
  func.func @transform_1(%arg0: i32) -> (i32, i32) {
    %c0_i32 = arith.constant 0 : i32
    %c0_i32_0 = arith.constant 0 : i32
    %c0_i32_1 = arith.constant 0 : i32
    return %c0_i32, %c0_i32_0 : i32, i32
  }
  func.func @transform_2(%arg0: i32) -> (i32, i32) {
    %c0_i32 = arith.constant 0 : i32
    %c0_i32_0 = arith.constant 0 : i32
    %c0_i32_1 = arith.constant 0 : i32
    return %c0_i32, %c0_i32_0 : i32, i32
  }
  func.func @transform_3(%arg0: i32) -> (i32, i32) {
    %c0_i32 = arith.constant 0 : i32
    %c0_i32_0 = arith.constant 0 : i32
    %c0_i32_1 = arith.constant 0 : i32
    return %c0_i32, %c0_i32_0 : i32, i32
  }
  func.func @transform_4(%arg0: i32) -> (i32, i32) {
    %c0_i32 = arith.constant 0 : i32
    %c0_i32_0 = arith.constant 0 : i32
    %c0_i32_1 = arith.constant 0 : i32
    return %c0_i32, %c0_i32_0 : i32, i32
  }
  func.func @transform_5(%arg0: i32) -> (i32, i32) {
    %c0_i32 = arith.constant 0 : i32
    %c0_i32_0 = arith.constant 0 : i32
    return %c0_i32, %arg0 : i32, i32
  }
}

</mosaic_0001>

<llo_original>
// kernel: net_forward.1
$region0: #{net_forward.1}
  #allocation0 [shape = 'u32[]', space=smem, size = 0x4, offset = 0x4, fixed_abs, tag = 'smem constant byte address 0x4 - core index']
  #allocation1 [shape = 'u32[144,128]{1,0:T(1,128)}', space=vmem, size = 0x12000, scoped, tag = 'internal scratch']
  #allocation2 [shape = 'f32[1,1]{1,0:T(1,128)S(6)}', space=smem, size = 0x200, scoped, tag = 'scoped memory for net_forward.1']
  %s0 = inlined_call_operand.vmem [shape: bf16[20,8], index: 0, kind: input, shape index: {}]
  %s1 = inlined_call_operand.vmem [shape: bf16[32,20], index: 1, kind: input, shape index: {}]
  %s2 = inlined_call_operand.vmem [shape: f32[32,1], index: 2, kind: input, shape index: {}]
  %s3 = inlined_call_operand.vmem [shape: f32[32,1], index: 3, kind: input, shape index: {}]
  %s4 = inlined_call_operand.<no memory space> [shape: f32[1,1], index: 4, kind: input, shape index: {}]
  %s5 = inlined_call_operand.hbm [shape: f32[1,8], index: 5, kind: output, shape index: {}]
  %s6 = sld [smem:[#allocation0]]
  $region30: #{net_forward.1} parent=0
    _
  %s8 = ssub.s32 1, %s6
  %s9 = scalar_select 0, %s8, %s6
  %10 = sst [smem:[#allocation2]] %s4
  $region1: #{net_forward.1} parent=0
    #allocation3 [shape = 'u8[512]{0}', space=vmem, size = 0x400, scoped, tag = 'output window, operand 0, single buffered']
    #allocation4 [shape = 's32[1]{0}', space=sflag, size = 0x4, scoped, tag = 'scoped memory for net_forward.1']
    %11 = vsyncpa [#allocation4], 0
    // Predicated region
    $region2: #{net_forward.1} parent=1 // pred_check
      _
    $region3: #{net_forward.1} parent=1 // pred_check_branch
      %13 = sbr.rel (0) target = $region5
    $region4: #{net_forward.1} parent=1 // pred_region
      _
    $region5: #{net_forward.1} parent=1 // pred_fallthru
      _
    // Predicated region
    $region6: #{net_forward.1} parent=1 // pred_check
      _
    $region7: #{net_forward.1} parent=1 // pred_check_branch
      %15 = sbr.rel (0) target = $region9
    $region8: #{net_forward.1} parent=1 // pred_region
      _
    $region9: #{net_forward.1} parent=1 // pred_fallthru
      _
    // Predicated region
    $region10: #{net_forward.1} parent=1 // pred_check
      _
    $region11: #{net_forward.1} parent=1 // pred_check_branch
      %17 = sbr.rel (0) target = $region13
    $region12: #{net_forward.1} parent=1 // pred_region
      _
    $region13: #{net_forward.1} parent=1 // pred_fallthru
      _
    // Predicated region
    $region14: #{net_forward.1} parent=1 // pred_check
      _
    $region15: #{net_forward.1} parent=1 // pred_check_branch
      %19 = sbr.rel (0) target = $region17
    $region16: #{net_forward.1} parent=1 // pred_region
      _
    $region17: #{net_forward.1} parent=1 // pred_fallthru
      _
    // Predicated region
    $region18: #{net_forward.1} parent=1 // pred_check
      _
    $region19: #{net_forward.1} parent=1 // pred_check_branch
      %21 = sbr.rel (0) target = $region21
    $region20: #{net_forward.1} parent=1 // pred_region
      _
    $region21: #{net_forward.1} parent=1 // pred_fallthru
      _
    %v23 = vld [vmem:[%s1] sm:$0xf]
    %v24 = vld [vmem:[%s1 + $0x4] sm:$0xf]
    %v25 = vld [vmem:[%s1 + $0x8] sm:$0xf]
    %v26 = vld [vmem:[%s1 + $0xc] sm:$0xf]
    %v27 = vld [vmem:[%s0] sm:$0xf]
    %v28 = vld [vmem:[%s0 + $0x4] sm:$0xf]
    %v29 = vld [vmem:[%s0 + $0x8] sm:$0x3]
    %v30 = vld [vmem:[%s2] sm:$0xff]
    %v31 = vld [vmem:[%s2 + $0x8] sm:$0xff]
    %v32 = vld [vmem:[%s2 + $0x10] sm:$0xff]
    %v33 = vld [vmem:[%s2 + $0x18] sm:$0xff]
    %35 = vset.pattern.permute.xlu0 0
    %36 = vperm.xlu0 %35, %v30
    %v37 = vpop.permute.xlu0 %36
    %40 = vset.pattern.permute.xlu0 0
    %41 = vperm.xlu0 %40, %v31
    %v42 = vpop.permute.xlu0 %41
    %45 = vset.pattern.permute.xlu0 0
    %46 = vperm.xlu0 %45, %v32
    %v47 = vpop.permute.xlu0 %46
    %50 = vset.pattern.permute.xlu0 0
    %51 = vperm.xlu0 %50, %v33
    %v52 = vpop.permute.xlu0 %51
    %v58 = vunpack.c.l.b16 %v23
    %v59 = vunpack.c.l.b16 %v24
    %v60 = vunpack.c.l.b16 %v25
    %v61 = vunpack.c.l.b16 %v26
    %v62 = vpack.c.b16 %v59, %v58
    %v63 = vpack.c.b16 %v61, %v60
    %v67 = vunpack.c.l.b16 %v27
    %v68 = vunpack.c.l.b16 %v28
    %v69 = vunpack.c.l.b16 %v29
    %v70 = vpack.c.b16 %v68, %v67
    %v71 = vpack.c.b16 %v69, %v69
    %vm73 = vcmask 162816
    %v75 = vsel %vm73, %v62, 0
    %v78 = vsel %vm73, %v63, 0
    %vm80 = vcmask 1041408
    %v82 = vsel %vm80, %v71, 0
    %84 = vmatprep.subr.bf16.mxu0 0
    %85 = vmatpush1.bf16.msra.mxu0 %v70
    %86 = vmatprep.subr.bf16.mxu0 0
    %87 = vmatpush1.bf16.msra.mxu0 %v82
    %88 = vmatprep.subr.bf16.mxu0 0
    %89 = vmatpush1.bf16.msra.mxu0 0
    %90 = vmatprep.subr.bf16.mxu0 0
    %91 = vmatpush1.bf16.msra.mxu0 0
    %92 = vmatprep.subr.bf16.mxu0 0
    %93 = vmatpush1.bf16.msra.mxu0 0
    %94 = vmatprep.subr.bf16.mxu0 0
    %95 = vmatpush1.bf16.msra.mxu0 0
    %96 = vmatprep.subr.bf16.mxu0 0
    %97 = vmatpush1.bf16.msra.mxu0 0
    %98 = vmatprep.subr.bf16.mxu0 0
    %99 = vmatpush1.bf16.msra.mxu0 0
    %100 = vmatprep.subr.bf16.mxu0 0
    %101 = vmatpush1.bf16.msra.mxu0 0
    %102 = vmatprep.subr.bf16.mxu0 0
    %103 = vmatpush1.bf16.msra.mxu0 0
    %104 = vmatprep.subr.bf16.mxu0 0
    %105 = vmatpush1.bf16.msra.mxu0 0
    %106 = vmatprep.subr.bf16.mxu0 0
    %107 = vmatpush1.bf16.msra.mxu0 0
    %108 = vmatprep.subr.bf16.mxu0 0
    %109 = vmatpush1.bf16.msra.mxu0 0
    %110 = vmatprep.subr.bf16.mxu0 0
    %111 = vmatpush1.bf16.msra.mxu0 0
    %112 = vmatprep.subr.bf16.mxu0 0
    %113 = vmatpush1.bf16.msra.mxu0 0
    %114 = vmatprep.subr.bf16.mxu0 0
    %115 = vmatpush1.bf16.msra.mxu0 0
    %116 = vmatprep.mubr.bf16.mxu0 0
    %117 = vmatmul.mubr.bf16.gmra.mrb[0].mxu0 %v75
    %v118 = vpop.f32.mrb[0].mxu0
    %v119 = vadd.f32 %v37, %v118
    %v120 = vpop.f32.mrb[0].mxu0
    %v121 = vpop.f32.mrb[0].mxu0
    %v122 = vadd.f32 %v42, %v121
    %v123 = vpop.f32.mrb[0].mxu0
    %124 = vmatprep.mubr.bf16.mxu0 0
    %125 = vmatmul.mubr.bf16.gmra.mrb[0].mxu0 %v78
    %v126 = vpop.f32.mrb[0].mxu0
    %v127 = vadd.f32 %v47, %v126
    %v128 = vpop.f32.mrb[0].mxu0
    %v129 = vpop.f32.mrb[0].mxu0
    %v130 = vadd.f32 %v52, %v129
    %v131 = vpop.f32.mrb[0].mxu0
    %132 = vdwg.mxu0
    %v133 = vmax.f32 %v119, 0.0
    %v134 = vmax.f32 %v122, 0.0
    %v135 = vmax.f32 %v127, 0.0
    %v136 = vmax.f32 %v130, 0.0
    %v137 = vld [vmem:[%s3] sm:$0xff]
    %v138 = vld [vmem:[%s3 + $0x8] sm:$0xff]
    %v139 = vld [vmem:[%s3 + $0x10] sm:$0xff]
    %v140 = vld [vmem:[%s3 + $0x18] sm:$0xff]
    %142 = vset.pattern.permute.xlu0 0
    %143 = vperm.xlu0 %142, %v137
    %v144 = vpop.permute.xlu0 %143
    %147 = vset.pattern.permute.xlu0 0
    %148 = vperm.xlu0 %147, %v138
    %v149 = vpop.permute.xlu0 %148
    %152 = vset.pattern.permute.xlu0 0
    %153 = vperm.xlu0 %152, %v139
    %v154 = vpop.permute.xlu0 %153
    %157 = vset.pattern.permute.xlu0 0
    %158 = vperm.xlu0 %157, %v140
    %v159 = vpop.permute.xlu0 %158
    %v161 = vmul.f32 %v133, %v144
    %v162 = vmul.f32 %v134, %v149
    %v163 = vmul.f32 %v135, %v154
    %v164 = vmul.f32 %v136, %v159
    %v165 = vadd.f32 %v161, %v162
    %v166 = vadd.f32 %v165, %v163
    %v167 = vadd.f32 %v166, %v164
    %v168 = vrot.slane %v167, 4
    %v169 = vadd.f32 %v167, %v168
    %v170 = vrot.slane %v169, 2
    %v171 = vadd.f32 %v169, %v170
    %v172 = vrot.slane %v171, 1
    %v173 = vadd.f32 %v171, %v172
    %s174 = sld [smem:[#allocation2]]
    %v175 = vstv %s174
    %v176 = vadd.f32 %v173, %v175
    %177 = vst [vmem:[#allocation3] sm:$0x1] %v176
    // Predicated region
    $region22: #{net_forward.1} parent=1 // pred_check
      _
    $region23: #{net_forward.1} parent=1 // pred_check_branch
      %179 = sbr.rel (0) target = $region25
    $region24: #{net_forward.1} parent=1 // pred_region
      %s181 = ssub.s32 16, 16
      %182 = vsyncadd [#allocation4], %s181
      %s184 = sshll.u32 [#allocation3], 4
      %s185 = int_to_ptr.vmem [resolvable:$true] %s184
      %187 = dma.vmem_to_hbm [thread:$0]  %s185, 16, %s5, [#allocation4]
    $region25: #{net_forward.1} parent=1 // pred_fallthru
      _
    // Predicated region
    $region26: #{net_forward.1} parent=1 // pred_check
      _
    $region27: #{net_forward.1} parent=1 // pred_check_branch
      %189 = sbr.rel (0) target = $region29
    $region28: #{net_forward.1} parent=1 // pred_region
      %190 = dma.done [#allocation4], 16
    $region29: #{net_forward.1} parent=1 // pred_fallthru
      _
    %191 = vsyncpa [#allocation4], 1

</llo_original>
